<compile_context>
chip_gen: v7x
topology: tpu7x:2x2x1
jax: 0.10.0
libtpu: 0.0.40
codegen_flags: <defaults>
</compile_context>

<pallas_src>
import math

import jax
import jax.numpy as jnp
from jax import lax
from jax.experimental import pallas as pl
from jax.experimental.pallas import tpu as pltpu

# Module-consistent small shapes.
B, S, E, H, F = 2, 8, 32, 4, 64
DH = E // H           # 8   head dim
TOK = B * S           # 16  flattened tokens
HT = H * TOK          # 64  (head, key) pairs
EP = 128              # lane-padded embedding width
EPS = 1e-5
NEG = -1e30

# ---- parameter-slab row layout (width 128, f32) ------------------------------
ROW_BQ, ROW_BK, ROW_BV, ROW_BO, ROW_B1, ROW_B2 = 0, 1, 2, 3, 4, 5
ROW_G1, ROW_BE1, ROW_G2, ROW_BE2 = 6, 7, 8, 9
ROW_MASK = 16     # (TOK, HT) additive batch mask (0 / -1e30), replicated per head
ROW_HSEL = 32     # (HT, E)  0/1 head-selector matrix
ROW_WO = 96       # (E, EP)  output projection, cols >= E are zero
ROW_W1 = 128      # (E, F)   FFN up
ROW_W2 = 160      # (F, EP)  FFN down, cols >= E are zero
SLAB_ROWS = 224


def transformer_block_kernel(x_ref, wqkv_ref, slab_ref, o_ref):
    x_pad = x_ref[...]                                   # (TOK, EP), cols >= E are 0
    x = x_pad[:, 0:E]                                    # (TOK, E)

    # ---- fused, pre-scaled, 128-lane-aligned QKV projection ------------------
    qkv = jnp.dot(x, wqkv_ref[...], preferred_element_type=jnp.float32)  # (TOK, 384)
    q = qkv[:, 0:E] + slab_ref[ROW_BQ:ROW_BQ + 1, 0:E]          # already * 1/sqrt(DH)
    k = qkv[:, 128:128 + E] + slab_ref[ROW_BK:ROW_BK + 1, 0:E]
    v = qkv[:, 256:256 + E] + slab_ref[ROW_BV:ROW_BV + 1, 0:E]

    # ---- all-head attention via head-selector matmuls (no stack/concat) ------
    hsel = slab_ref[ROW_HSEL:ROW_HSEL + HT, 0:E]         # (HT, E) 0/1 selector
    kexp = jnp.concatenate([k] * H, axis=0) * hsel       # (HT, E): head-blocked keys
    vexp = jnp.concatenate([v] * H, axis=0) * hsel       # (HT, E): head-blocked values

    # scores for all (head, key) pairs in one MXU push: s[i, h*TOK + j]
    s = lax.dot_general(q, kexp, (((1,), (1,)), ((), ())),
                        preferred_element_type=jnp.float32)      # (TOK, HT)
    s = s + slab_ref[ROW_MASK:ROW_MASK + TOK, 0:HT]      # block-diag batch mask
    s = s - jnp.max(s, axis=-1, keepdims=True)           # row max: constant per head
    p = jnp.exp(s)

    denom = jnp.dot(p, hsel, preferred_element_type=jnp.float32)  # (TOK, E) per-head sums
    ctx = jnp.dot(p, vexp, preferred_element_type=jnp.float32)    # (TOK, E) heads merged
    ctx = ctx * pl.reciprocal(denom, approx=False)

    attn = jnp.dot(ctx, slab_ref[ROW_WO:ROW_WO + E, :],
                   preferred_element_type=jnp.float32)
    attn = attn + slab_ref[ROW_BO:ROW_BO + 1, :]         # (TOK, EP), zero tail

    # ---- residual + LayerNorm 1 (sum-based stats; padded tail stays zero) ----
    h1 = x_pad + attn
    mu1 = jnp.sum(h1, axis=-1, keepdims=True) * (1.0 / E)
    var1 = jnp.sum(h1 * h1, axis=-1, keepdims=True) * (1.0 / E) - mu1 * mu1
    h1n = (h1 - mu1) * lax.rsqrt(var1 + EPS)
    h1n = h1n * slab_ref[ROW_G1:ROW_G1 + 1, :] + slab_ref[ROW_BE1:ROW_BE1 + 1, :]

    # ---- FFN ------------------------------------------------------------------
    f = jnp.dot(h1n[:, 0:E], slab_ref[ROW_W1:ROW_W1 + E, 0:F],
                preferred_element_type=jnp.float32)
    f = jnp.maximum(f + slab_ref[ROW_B1:ROW_B1 + 1, 0:F], 0.0)    # (TOK, F)
    f2 = jnp.dot(f, slab_ref[ROW_W2:ROW_W2 + F, :],
                 preferred_element_type=jnp.float32)
    f2 = f2 + slab_ref[ROW_B2:ROW_B2 + 1, :]             # (TOK, EP), zero tail

    # ---- residual + LayerNorm 2, lane-dense (TOK, 128) store ------------------
    h2 = h1n + f2
    mu2 = jnp.sum(h2, axis=-1, keepdims=True) * (1.0 / E)
    var2 = jnp.sum(h2 * h2, axis=-1, keepdims=True) * (1.0 / E) - mu2 * mu2
    out = (h2 - mu2) * lax.rsqrt(var2 + EPS)
    o_ref[...] = out * slab_ref[ROW_G2:ROW_G2 + 1, :] + slab_ref[ROW_BE2:ROW_BE2 + 1, :]


@jax.jit
def transformer_block(x, wqkv, slab):
    """x: (B, S, E) f32 -> (B, S, E). Single grid-less pallas_call, 3 input DMAs."""
    x_pad = jnp.zeros((TOK, EP), jnp.float32).at[:, :E].set(x.reshape(TOK, E))
    vmem = pl.BlockSpec(memory_space=pltpu.MemorySpace.VMEM)
    out = pl.pallas_call(
        transformer_block_kernel,
        out_shape=jax.ShapeDtypeStruct((TOK, EP), jnp.float32),
        in_specs=[vmem, vmem, vmem],
        out_specs=vmem,
    )(x_pad, wqkv, slab)
    return out[:, :E].reshape(B, S, E)


def init_params(key):
    """Raw (unpacked) parameters; weights stored (in_dim, out_dim) so y = x @ W + b."""
    ks = jax.random.split(key, 16)

    def xavier(k, shape):
        bound = math.sqrt(6.0 / (shape[0] + shape[1]))
        return jax.random.uniform(k, shape, jnp.float32, -bound, bound)

    def vec(k, n, scale=0.3):
        return scale * jax.random.normal(k, (n,), jnp.float32)

    return dict(
        wq=xavier(ks[0], (E, E)), wk=xavier(ks[1], (E, E)), wv=xavier(ks[2], (E, E)),
        wo=xavier(ks[3], (E, E)), w1=xavier(ks[4], (E, F)), w2=xavier(ks[5], (F, E)),
        bq=vec(ks[6], E), bk=vec(ks[7], E), bv=vec(ks[8], E), bo=vec(ks[9], E),
        b1=vec(ks[10], F), b2=vec(ks[11], E),
        g1=1.0 + vec(ks[12], E, 0.1), be1=vec(ks[13], E, 0.1),
        g2=1.0 + vec(ks[14], E, 0.1), be2=vec(ks[15], E, 0.1),
    )


def pack_params(p):
    """Pack raw params into the 2 kernel weight inputs: fused/padded QKV + param slab."""
    scale = 1.0 / math.sqrt(DH)

    # Fused QKV weight with Q/K/V output blocks at 128-lane-aligned offsets;
    # 1/sqrt(DH) folded into the Q block.
    wqkv = jnp.zeros((E, 3 * EP), jnp.float32)
    wqkv = wqkv.at[:, 0:E].set(p["wq"] * scale)
    wqkv = wqkv.at[:, EP:EP + E].set(p["wk"])
    wqkv = wqkv.at[:, 2 * EP:2 * EP + E].set(p["wv"])

    slab = jnp.zeros((SLAB_ROWS, EP), jnp.float32)
    slab = slab.at[ROW_BQ, :E].set(p["bq"] * scale)
    slab = slab.at[ROW_BK, :E].set(p["bk"])
    slab = slab.at[ROW_BV, :E].set(p["bv"])
    slab = slab.at[ROW_BO, :E].set(p["bo"])
    slab = slab.at[ROW_B1, :F].set(p["b1"])
    slab = slab.at[ROW_B2, :E].set(p["b2"])
    slab = slab.at[ROW_G1, :E].set(p["g1"])      # zero-padded tails keep the padded
    slab = slab.at[ROW_BE1, :E].set(p["be1"])    # lanes exactly zero after each LN
    slab = slab.at[ROW_G2, :E].set(p["g2"])
    slab = slab.at[ROW_BE2, :E].set(p["be2"])

    # Additive batch mask (tokens attend only within their own batch),
    # replicated once per head along the key axis.
    tok = jnp.arange(TOK)
    same = (tok[:, None] // S) == (tok[None, :] // S)
    addmask = jnp.where(same, 0.0, NEG).astype(jnp.float32)          # (TOK, TOK)
    slab = slab.at[ROW_MASK:ROW_MASK + TOK, :HT].set(jnp.tile(addmask, (1, H)))

    # Head-selector: hsel[h*TOK + j, e] = 1  iff  e // DH == h.
    r = jnp.arange(HT)
    e = jnp.arange(E)
    hsel = ((e[None, :] // DH) == (r[:, None] // TOK)).astype(jnp.float32)
    slab = slab.at[ROW_HSEL:ROW_HSEL + HT, :E].set(hsel)

    slab = slab.at[ROW_WO:ROW_WO + E, :E].set(p["wo"])
    slab = slab.at[ROW_W1:ROW_W1 + E, :F].set(p["w1"])
    slab = slab.at[ROW_W2:ROW_W2 + F, :E].set(p["w2"])
    return wqkv, slab


def reference(x, p):
    """Pure-JAX eval-mode reference matching the PyTorch TransformerBlock forward."""
    hi = jax.lax.Precision.HIGHEST
    scale = 1.0 / math.sqrt(DH)

    def ln(h, g, b):
        mu = jnp.mean(h, axis=-1, keepdims=True)
        var = jnp.mean((h - mu) ** 2, axis=-1, keepdims=True)
        return (h - mu) * lax.rsqrt(var + EPS) * g + b

    q = jnp.dot(x, p["wq"], precision=hi) + p["bq"]
    k = jnp.dot(x, p["wk"], precision=hi) + p["bk"]
    v = jnp.dot(x, p["wv"], precision=hi) + p["bv"]
    qh = q.reshape(B, S, H, DH)
    kh = k.reshape(B, S, H, DH)
    vh = v.reshape(B, S, H, DH)
    s = jnp.einsum("bqhd,bkhd->bhqk", qh, kh, precision=hi) * scale
    a = jax.nn.softmax(s, axis=-1)
    ctx = jnp.einsum("bhqk,bkhd->bqhd", a, vh, precision=hi).reshape(B, S, E)
    attn = jnp.dot(ctx, p["wo"], precision=hi) + p["bo"]

    h1 = ln(x + attn, p["g1"], p["be1"])
    f = jnp.maximum(jnp.dot(h1, p["w1"], precision=hi) + p["b1"], 0.0)
    f = jnp.dot(f, p["w2"], precision=hi) + p["b2"]
    return ln(h1 + f, p["g2"], p["be2"])


if __name__ == "__main__":
    key = jax.random.PRNGKey(0)
    kx, kp = jax.random.split(key)
    x = jax.random.normal(kx, (B, S, E), jnp.float32)
    raw = init_params(kp)
    wqkv, slab = pack_params(raw)

    out = transformer_block(x, wqkv, slab)
    out = jax.block_until_ready(out)
    assert out.shape == (B, S, E) and out.dtype == jnp.float32
    assert bool(jnp.all(jnp.isfinite(out)))

    ref = reference(x, raw)
    assert bool(jnp.allclose(out, ref, atol=3e-2, rtol=3e-2)), (
        f"max|err| = {jnp.max(jnp.abs(out - ref))}")
    print("KERNEL_OK")
</pallas_src>

<mosaic_0001>
module attributes {stable_mosaic.version = 11 : i64} {
  func.func @transformer_block_kernel(%arg0: memref<16x128xf32, #tpu.memory_space<vmem>>, %arg1: memref<32x384xf32, #tpu.memory_space<vmem>>, %arg2: memref<224x128xf32, #tpu.memory_space<vmem>>, %arg3: memref<16x128xf32, #tpu.memory_space<vmem>>) attributes {dimension_semantics = [], scalar_prefetch = 0 : i64, scratch_operands = 0 : i64, tpu.core_type = #tpu.core_type<tc>} {
    %c0 = arith.constant 0 : index
    %c0_0 = arith.constant 0 : index
    %0 = vector.load %arg0[%c0, %c0_0] : memref<16x128xf32, #tpu.memory_space<vmem>>, vector<16x128xf32>
    %1 = vector.extract_strided_slice %0 {offsets = [0, 0], sizes = [16, 32], strides = [1, 1]} : vector<16x128xf32> to vector<16x32xf32>
    %c0_1 = arith.constant 0 : index
    %c0_2 = arith.constant 0 : index
    %2 = vector.load %arg1[%c0_1, %c0_2] : memref<32x384xf32, #tpu.memory_space<vmem>>, vector<32x384xf32>
    %cst = arith.constant dense<0.000000e+00> : vector<16x384xf32>
    %3 = tpu.matmul %1, %2, %cst {dimension_numbers = #tpu.dot_dimension_numbers<[1], [0], [0], [1], [0, 0, 1, 1], [], []>} : vector<16x32xf32>, vector<32x384xf32>, vector<16x384xf32> -> vector<16x384xf32>
    %4 = vector.extract_strided_slice %3 {offsets = [0, 0], sizes = [16, 32], strides = [1, 1]} : vector<16x384xf32> to vector<16x32xf32>
    %c0_3 = arith.constant 0 : index
    %c0_4 = arith.constant 0 : index
    %5 = vector.load %arg2[%c0_3, %c0_4] : memref<224x128xf32, #tpu.memory_space<vmem>>, vector<1x32xf32>
    %6 = vector.broadcast %5 : vector<1x32xf32> to vector<16x32xf32>
    %7 = arith.addf %4, %6 : vector<16x32xf32>
    %8 = vector.extract_strided_slice %3 {offsets = [0, 128], sizes = [16, 32], strides = [1, 1]} : vector<16x384xf32> to vector<16x32xf32>
    %c1 = arith.constant 1 : index
    %c0_5 = arith.constant 0 : index
    %9 = vector.load %arg2[%c1, %c0_5] : memref<224x128xf32, #tpu.memory_space<vmem>>, vector<1x32xf32>
    %10 = vector.broadcast %9 : vector<1x32xf32> to vector<16x32xf32>
    %11 = arith.addf %8, %10 : vector<16x32xf32>
    %12 = vector.extract_strided_slice %3 {offsets = [0, 256], sizes = [16, 32], strides = [1, 1]} : vector<16x384xf32> to vector<16x32xf32>
    %c2 = arith.constant 2 : index
    %c0_6 = arith.constant 0 : index
    %13 = vector.load %arg2[%c2, %c0_6] : memref<224x128xf32, #tpu.memory_space<vmem>>, vector<1x32xf32>
    %14 = vector.broadcast %13 : vector<1x32xf32> to vector<16x32xf32>
    %15 = arith.addf %12, %14 : vector<16x32xf32>
    %c32 = arith.constant 32 : index
    %c0_7 = arith.constant 0 : index
    %16 = vector.load %arg2[%c32, %c0_7] : memref<224x128xf32, #tpu.memory_space<vmem>>, vector<64x32xf32>
    %17 = tpu.concatenate %11, %11, %11, %11 in 0 : vector<16x32xf32>, vector<16x32xf32>, vector<16x32xf32>, vector<16x32xf32> -> vector<64x32xf32>
    %18 = arith.mulf %17, %16 : vector<64x32xf32>
    %19 = tpu.concatenate %15, %15, %15, %15 in 0 : vector<16x32xf32>, vector<16x32xf32>, vector<16x32xf32>, vector<16x32xf32> -> vector<64x32xf32>
    %20 = arith.mulf %19, %16 : vector<64x32xf32>
    %cst_8 = arith.constant dense<0.000000e+00> : vector<16x64xf32>
    %21 = tpu.matmul %7, %18, %cst_8 {dimension_numbers = #tpu.dot_dimension_numbers<[1], [1], [0], [0], [0, 0, 1, 0], [], []>} : vector<16x32xf32>, vector<64x32xf32>, vector<16x64xf32> -> vector<16x64xf32>
    %c16 = arith.constant 16 : index
    %c0_9 = arith.constant 0 : index
    %22 = vector.load %arg2[%c16, %c0_9] : memref<224x128xf32, #tpu.memory_space<vmem>>, vector<16x64xf32>
    %23 = arith.addf %21, %22 : vector<16x64xf32>
    %cst_10 = arith.constant dense<0xFF800000> : vector<16xf32>
    %24 = vector.multi_reduction <maximumf>, %23, %cst_10 [1] : vector<16x64xf32> to vector<16xf32>
    %25 = vector.shape_cast %24 : vector<16xf32> to vector<16x1xf32>
    %26 = vector.broadcast %25 : vector<16x1xf32> to vector<16x64xf32>
    %27 = arith.subf %23, %26 : vector<16x64xf32>
    %28 = math.exp %27 : vector<16x64xf32>
    %cst_11 = arith.constant dense<0.000000e+00> : vector<16x32xf32>
    %29 = tpu.matmul %28, %16, %cst_11 {dimension_numbers = #tpu.dot_dimension_numbers<[1], [0], [0], [1], [0, 0, 1, 1], [], []>} : vector<16x64xf32>, vector<64x32xf32>, vector<16x32xf32> -> vector<16x32xf32>
    %cst_12 = arith.constant dense<0.000000e+00> : vector<16x32xf32>
    %30 = tpu.matmul %28, %20, %cst_12 {dimension_numbers = #tpu.dot_dimension_numbers<[1], [0], [0], [1], [0, 0, 1, 1], [], []>} : vector<16x64xf32>, vector<64x32xf32>, vector<16x32xf32> -> vector<16x32xf32>
    %31 = tpu.reciprocal %29 : vector<16x32xf32> -> vector<16x32xf32>
    %32 = arith.mulf %30, %31 : vector<16x32xf32>
    %c96 = arith.constant 96 : index
    %c0_13 = arith.constant 0 : index
    %33 = vector.load %arg2[%c96, %c0_13] : memref<224x128xf32, #tpu.memory_space<vmem>>, vector<32x128xf32>
    %cst_14 = arith.constant dense<0.000000e+00> : vector<16x128xf32>
    %34 = tpu.matmul %32, %33, %cst_14 {dimension_numbers = #tpu.dot_dimension_numbers<[1], [0], [0], [1], [0, 0, 1, 1], [], []>} : vector<16x32xf32>, vector<32x128xf32>, vector<16x128xf32> -> vector<16x128xf32>
    %c3 = arith.constant 3 : index
    %c0_15 = arith.constant 0 : index
    %35 = vector.load %arg2[%c3, %c0_15] : memref<224x128xf32, #tpu.memory_space<vmem>>, vector<1x128xf32>
    %36 = vector.broadcast %35 : vector<1x128xf32> to vector<16x128xf32>
    %37 = arith.addf %34, %36 : vector<16x128xf32>
    %38 = arith.addf %0, %37 : vector<16x128xf32>
    %cst_16 = arith.constant dense<0.000000e+00> : vector<16xf32>
    %39 = vector.multi_reduction <add>, %38, %cst_16 [1] : vector<16x128xf32> to vector<16xf32>
    %40 = vector.shape_cast %39 : vector<16xf32> to vector<16x1xf32>
    %cst_17 = arith.constant 3.125000e-02 : f32
    %41 = vector.broadcast %cst_17 : f32 to vector<16x1xf32>
    %42 = arith.mulf %40, %41 : vector<16x1xf32>
    %43 = arith.mulf %38, %38 : vector<16x128xf32>
    %cst_18 = arith.constant dense<0.000000e+00> : vector<16xf32>
    %44 = vector.multi_reduction <add>, %43, %cst_18 [1] : vector<16x128xf32> to vector<16xf32>
    %45 = vector.shape_cast %44 : vector<16xf32> to vector<16x1xf32>
    %cst_19 = arith.constant 3.125000e-02 : f32
    %46 = vector.broadcast %cst_19 : f32 to vector<16x1xf32>
    %47 = arith.mulf %45, %46 : vector<16x1xf32>
    %48 = arith.mulf %42, %42 : vector<16x1xf32>
    %49 = arith.subf %47, %48 : vector<16x1xf32>
    %50 = vector.broadcast %42 : vector<16x1xf32> to vector<16x128xf32>
    %51 = arith.subf %38, %50 : vector<16x128xf32>
    %cst_20 = arith.constant 9.99999974E-6 : f32
    %52 = vector.broadcast %cst_20 : f32 to vector<16x1xf32>
    %53 = arith.addf %49, %52 : vector<16x1xf32>
    %54 = math.rsqrt %53 : vector<16x1xf32>
    %55 = vector.broadcast %54 : vector<16x1xf32> to vector<16x128xf32>
    %56 = arith.mulf %51, %55 : vector<16x128xf32>
    %c6 = arith.constant 6 : index
    %c0_21 = arith.constant 0 : index
    %57 = vector.load %arg2[%c6, %c0_21] : memref<224x128xf32, #tpu.memory_space<vmem>>, vector<1x128xf32>
    %58 = vector.broadcast %57 : vector<1x128xf32> to vector<16x128xf32>
    %59 = arith.mulf %56, %58 : vector<16x128xf32>
    %c7 = arith.constant 7 : index
    %c0_22 = arith.constant 0 : index
    %60 = vector.load %arg2[%c7, %c0_22] : memref<224x128xf32, #tpu.memory_space<vmem>>, vector<1x128xf32>
    %61 = vector.broadcast %60 : vector<1x128xf32> to vector<16x128xf32>
    %62 = arith.addf %59, %61 : vector<16x128xf32>
    %63 = vector.extract_strided_slice %62 {offsets = [0, 0], sizes = [16, 32], strides = [1, 1]} : vector<16x128xf32> to vector<16x32xf32>
    %c128 = arith.constant 128 : index
    %c0_23 = arith.constant 0 : index
    %64 = vector.load %arg2[%c128, %c0_23] : memref<224x128xf32, #tpu.memory_space<vmem>>, vector<32x64xf32>
    %cst_24 = arith.constant dense<0.000000e+00> : vector<16x64xf32>
    %65 = tpu.matmul %63, %64, %cst_24 {dimension_numbers = #tpu.dot_dimension_numbers<[1], [0], [0], [1], [0, 0, 1, 1], [], []>} : vector<16x32xf32>, vector<32x64xf32>, vector<16x64xf32> -> vector<16x64xf32>
    %c4 = arith.constant 4 : index
    %c0_25 = arith.constant 0 : index
    %66 = vector.load %arg2[%c4, %c0_25] : memref<224x128xf32, #tpu.memory_space<vmem>>, vector<1x64xf32>
    %67 = vector.broadcast %66 : vector<1x64xf32> to vector<16x64xf32>
    %68 = arith.addf %65, %67 : vector<16x64xf32>
    %cst_26 = arith.constant 0.000000e+00 : f32
    %69 = vector.broadcast %cst_26 : f32 to vector<16x64xf32>
    %70 = arith.maximumf %68, %69 : vector<16x64xf32>
    %c160 = arith.constant 160 : index
    %c0_27 = arith.constant 0 : index
    %71 = vector.load %arg2[%c160, %c0_27] : memref<224x128xf32, #tpu.memory_space<vmem>>, vector<64x128xf32>
    %cst_28 = arith.constant dense<0.000000e+00> : vector<16x128xf32>
    %72 = tpu.matmul %70, %71, %cst_28 {dimension_numbers = #tpu.dot_dimension_numbers<[1], [0], [0], [1], [0, 0, 1, 1], [], []>} : vector<16x64xf32>, vector<64x128xf32>, vector<16x128xf32> -> vector<16x128xf32>
    %c5 = arith.constant 5 : index
    %c0_29 = arith.constant 0 : index
    %73 = vector.load %arg2[%c5, %c0_29] : memref<224x128xf32, #tpu.memory_space<vmem>>, vector<1x128xf32>
    %74 = vector.broadcast %73 : vector<1x128xf32> to vector<16x128xf32>
    %75 = arith.addf %72, %74 : vector<16x128xf32>
    %76 = arith.addf %62, %75 : vector<16x128xf32>
    %cst_30 = arith.constant dense<0.000000e+00> : vector<16xf32>
    %77 = vector.multi_reduction <add>, %76, %cst_30 [1] : vector<16x128xf32> to vector<16xf32>
    %78 = vector.shape_cast %77 : vector<16xf32> to vector<16x1xf32>
    %cst_31 = arith.constant 3.125000e-02 : f32
    %79 = vector.broadcast %cst_31 : f32 to vector<16x1xf32>
    %80 = arith.mulf %78, %79 : vector<16x1xf32>
    %81 = arith.mulf %76, %76 : vector<16x128xf32>
    %cst_32 = arith.constant dense<0.000000e+00> : vector<16xf32>
    %82 = vector.multi_reduction <add>, %81, %cst_32 [1] : vector<16x128xf32> to vector<16xf32>
    %83 = vector.shape_cast %82 : vector<16xf32> to vector<16x1xf32>
    %cst_33 = arith.constant 3.125000e-02 : f32
    %84 = vector.broadcast %cst_33 : f32 to vector<16x1xf32>
    %85 = arith.mulf %83, %84 : vector<16x1xf32>
    %86 = arith.mulf %80, %80 : vector<16x1xf32>
    %87 = arith.subf %85, %86 : vector<16x1xf32>
    %88 = vector.broadcast %80 : vector<16x1xf32> to vector<16x128xf32>
    %89 = arith.subf %76, %88 : vector<16x128xf32>
    %cst_34 = arith.constant 9.99999974E-6 : f32
    %90 = vector.broadcast %cst_34 : f32 to vector<16x1xf32>
    %91 = arith.addf %87, %90 : vector<16x1xf32>
    %92 = math.rsqrt %91 : vector<16x1xf32>
    %93 = vector.broadcast %92 : vector<16x1xf32> to vector<16x128xf32>
    %94 = arith.mulf %89, %93 : vector<16x128xf32>
    %c8 = arith.constant 8 : index
    %c0_35 = arith.constant 0 : index
    %95 = vector.load %arg2[%c8, %c0_35] : memref<224x128xf32, #tpu.memory_space<vmem>>, vector<1x128xf32>
    %96 = vector.broadcast %95 : vector<1x128xf32> to vector<16x128xf32>
    %97 = arith.mulf %94, %96 : vector<16x128xf32>
    %c9 = arith.constant 9 : index
    %c0_36 = arith.constant 0 : index
    %98 = vector.load %arg2[%c9, %c0_36] : memref<224x128xf32, #tpu.memory_space<vmem>>, vector<1x128xf32>
    %99 = vector.broadcast %98 : vector<1x128xf32> to vector<16x128xf32>
    %100 = arith.addf %97, %99 : vector<16x128xf32>
    %c0_37 = arith.constant 0 : index
    %c0_38 = arith.constant 0 : index
    %101 = vector.load %arg3[%c0_37, %c0_38] : memref<16x128xf32, #tpu.memory_space<vmem>>, vector<16x128xf32>
    tpu.vector_store %arg3[%c0_37, %c0_38], %100 {strides = array<i32>} : memref<16x128xf32, #tpu.memory_space<vmem>>, vector<16x128xf32>,
    return
  }
}

</mosaic_0001>

<llo_original>
// kernel: transformer_block.1
$region0: #{transformer_block.1}
  #allocation0 [shape = 'u32[]', space=smem, size = 0x4, offset = 0x4, fixed_abs, tag = 'smem constant byte address 0x4 - core index']
  #allocation1 [shape = 'u32[144,128]{1,0:T(1,128)}', space=vmem, size = 0x12000, scoped, tag = 'internal scratch']
  %s0 = inlined_call_operand.vmem [shape: f32[16,128], index: 0, kind: input, shape index: {}]
  %s1 = inlined_call_operand.hbm [shape: f32[32,384], index: 1, kind: input, shape index: {}]
  %s2 = inlined_call_operand.hbm [shape: f32[224,128], index: 2, kind: input, shape index: {}]
  %s3 = inlined_call_operand.vmem [shape: f32[16,128], index: 3, kind: output, shape index: {}]
  %s4 = sld [smem:[#allocation0]]
  $region30: #{transformer_block.1} parent=0
    _
  %s6 = ssub.s32 1, %s4
  %s7 = scalar_select 0, %s6, %s4
  $region1: #{transformer_block.1} parent=0
    #allocation2 [shape = 'u8[49152]{0}', space=vmem, size = 0xc000, scoped, tag = 'input window, operand 1, single buffered']
    #allocation3 [shape = 's32[1]{0}', space=sflag, size = 0x4, scoped, tag = 'scoped memory for transformer_block.1']
    #allocation4 [shape = 'u8[114688]{0}', space=vmem, size = 0x1c000, scoped, tag = 'input window, operand 2, single buffered']
    #allocation5 [shape = 's32[1]{0}', space=sflag, size = 0x4, scoped, tag = 'scoped memory for transformer_block.1']
    %8 = vsyncpa [#allocation3], 0
    %9 = vsyncpa [#allocation5], 0
    // Predicated region
    $region2: #{transformer_block.1} parent=1 // pred_check
      _
    $region3: #{transformer_block.1} parent=1 // pred_check_branch
      %11 = sbr.rel (0) target = $region5
    $region4: #{transformer_block.1} parent=1 // pred_region
      _
    $region5: #{transformer_block.1} parent=1 // pred_fallthru
      _
    // Predicated region
    $region6: #{transformer_block.1} parent=1 // pred_check
      _
    $region7: #{transformer_block.1} parent=1 // pred_check_branch
      %13 = sbr.rel (0) target = $region9
    $region8: #{transformer_block.1} parent=1 // pred_region
      %s15 = ssub.s32 1536, 1536
      %16 = vsyncadd [#allocation3], %s15
      %s17 = sshll.u32 [#allocation2], 4
      %s18 = int_to_ptr.vmem [resolvable:$true] %s17
      %23 = dma.hbm_to_vmem [thread:$0]  %s1, 1536, %s18, [#allocation3], 384, 384, 24
    $region9: #{transformer_block.1} parent=1 // pred_fallthru
      _
    // Predicated region
    $region10: #{transformer_block.1} parent=1 // pred_check
      _
    $region11: #{transformer_block.1} parent=1 // pred_check_branch
      %25 = sbr.rel (0) target = $region13
    $region12: #{transformer_block.1} parent=1 // pred_region
      %s27 = ssub.s32 3584, 3584
      %28 = vsyncadd [#allocation5], %s27
      %s29 = sshll.u32 [#allocation4], 4
      %s30 = int_to_ptr.vmem [resolvable:$true] %s29
      %35 = dma.hbm_to_vmem [thread:$0]  %s2, 3584, %s30, [#allocation5], 128, 128, 8
    $region13: #{transformer_block.1} parent=1 // pred_fallthru
      _
    // Predicated region
    $region14: #{transformer_block.1} parent=1 // pred_check
      _
    $region15: #{transformer_block.1} parent=1 // pred_check_branch
      %37 = sbr.rel (0) target = $region17
    $region16: #{transformer_block.1} parent=1 // pred_region
      %38 = dma.done [#allocation3], 1536
    $region17: #{transformer_block.1} parent=1 // pred_fallthru
      _
    // Predicated region
    $region18: #{transformer_block.1} parent=1 // pred_check
      _
    $region19: #{transformer_block.1} parent=1 // pred_check_branch
      %40 = sbr.rel (0) target = $region21
    $region20: #{transformer_block.1} parent=1 // pred_region
      %41 = dma.done [#allocation5], 3584
    $region21: #{transformer_block.1} parent=1 // pred_fallthru
      _
    %v42 = vld [vmem:[%s0] sm:$0xff]
    %v43 = vld [vmem:[%s0 + $0x8] sm:$0xff]
    %v44 = vld [vmem:[#allocation2] sm:$0xff]
    %v45 = vld [vmem:[#allocation2 + $0x8] sm:$0xff]
    %v46 = vld [vmem:[#allocation2 + $0x10] sm:$0xff]
    %v47 = vld [vmem:[#allocation2 + $0x18] sm:$0xff]
    %v48 = vld [vmem:[#allocation2 + $0x20] sm:$0xff]
    %v49 = vld [vmem:[#allocation2 + $0x28] sm:$0xff]
    %v50 = vld [vmem:[#allocation2 + $0x30] sm:$0xff]
    %v51 = vld [vmem:[#allocation2 + $0x38] sm:$0xff]
    %v52 = vld [vmem:[#allocation2 + $0x40] sm:$0xff]
    %v53 = vld [vmem:[#allocation2 + $0x48] sm:$0xff]
    %v54 = vld [vmem:[#allocation2 + $0x50] sm:$0xff]
    %v55 = vld [vmem:[#allocation2 + $0x58] sm:$0xff]
    %vm56 = vcmask 261120
    %v58 = vsel %vm56, %v42, 0
    %v61 = vsel %vm56, %v43, 0
    %63 = vmatprep.subr.mxu0 %v45
    %64 = vmatpush1.msra.mxu0 %v44
    %65 = vmatprep.subr.mxu0 %v48
    %66 = vmatpush1.msra.mxu0 %v47
    %67 = vmatprep.subr.mxu0 %v51
    %68 = vmatpush1.msra.mxu0 %v50
    %69 = vmatprep.subr.mxu0 %v54
    %70 = vmatpush1.msra.mxu0 %v53
    %71 = vmatprep.subr.mxu0 0.0
    %72 = vmatpush1.msra.mxu0 0.0
    %73 = vmatprep.subr.mxu0 0.0
    %74 = vmatpush1.msra.mxu0 0.0
    %75 = vmatprep.subr.mxu0 0.0
    %76 = vmatpush1.msra.mxu0 0.0
    %77 = vmatprep.subr.mxu0 0.0
    %78 = vmatpush1.msra.mxu0 0.0
    %79 = vmatprep.subr.mxu0 0.0
    %80 = vmatpush1.msra.mxu0 0.0
    %81 = vmatprep.subr.mxu0 0.0
    %82 = vmatpush1.msra.mxu0 0.0
    %83 = vmatprep.subr.mxu0 0.0
    %84 = vmatpush1.msra.mxu0 0.0
    %85 = vmatprep.subr.mxu0 0.0
    %86 = vmatpush1.msra.mxu0 0.0
    %87 = vmatprep.subr.mxu0 0.0
    %88 = vmatpush1.msra.mxu0 0.0
    %89 = vmatprep.subr.mxu0 0.0
    %90 = vmatpush1.msra.mxu0 0.0
    %91 = vmatprep.subr.mxu0 0.0
    %92 = vmatpush1.msra.mxu0 0.0
    %93 = vmatprep.subr.mxu0 0.0
    %94 = vmatpush1.msra.mxu0 0.0
    %95 = vmatprep.subr.mxu0 0.0
    %96 = vmatpush1.msra.mxu0 0.0
    %97 = vmatprep.subr.mxu0 0.0
    %98 = vmatpush1.msra.mxu0 0.0
    %99 = vmatprep.subr.mxu0 0.0
    %100 = vmatpush1.msra.mxu0 0.0
    %101 = vmatprep.subr.mxu0 0.0
    %102 = vmatpush1.msra.mxu0 0.0
    %103 = vmatprep.subr.mxu0 0.0
    %104 = vmatpush1.msra.mxu0 0.0
    %105 = vmatprep.subr.mxu0 0.0
    %106 = vmatpush1.msra.mxu0 0.0
    %107 = vmatprep.subr.mxu0 0.0
    %108 = vmatpush1.msra.mxu0 0.0
    %109 = vmatprep.subr.mxu0 0.0
    %110 = vmatpush1.msra.mxu0 0.0
    %111 = vmatprep.subr.mxu0 0.0
    %112 = vmatpush1.msra.mxu0 0.0
    %113 = vmatprep.subr.mxu0 0.0
    %114 = vmatpush1.msra.mxu0 0.0
    %115 = vmatprep.subr.mxu0 0.0
    %116 = vmatpush1.msra.mxu0 0.0
    %117 = vmatprep.subr.mxu0 0.0
    %118 = vmatpush1.msra.mxu0 0.0
    %119 = vmatprep.subr.mxu0 0.0
    %120 = vmatpush1.msra.mxu0 0.0
    %121 = vmatprep.subr.mxu0 0.0
    %122 = vmatpush1.msra.mxu0 0.0
    %123 = vmatprep.subr.mxu0 0.0
    %124 = vmatpush1.msra.mxu0 0.0
    %125 = vmatprep.subr.mxu0 0.0
    %126 = vmatpush1.msra.mxu0 0.0
    %127 = vmatprep.mubr.f32.mxu0 0.0
    %128 = vmatmul.mubr.f32.gmra.mrb[0].mxu0 %v58
    %v129 = vpop.f32.mrb[0].mxu0
    %v130 = vadd.f32 0.0, %v129
    %v131 = vpop.f32.mrb[0].mxu0
    %v132 = vadd.f32 0.0, %v131
    %133 = vmatprep.mubr.f32.mxu0 0.0
    %134 = vmatmul.mubr.f32.gmra.mrb[0].mxu0 %v61
    %v135 = vpop.f32.mrb[0].mxu0
    %v136 = vadd.f32 0.0, %v135
    %v137 = vpop.f32.mrb[0].mxu0
    %v138 = vadd.f32 0.0, %v137
    %139 = vdwg.mxu0
    %140 = vmatprep.subr.mxu0 0.0
    %141 = vmatpush1.msra.mxu0 %v46
    %142 = vmatprep.subr.mxu0 0.0
    %143 = vmatpush1.msra.mxu0 %v49
    %144 = vmatprep.subr.mxu0 0.0
    %145 = vmatpush1.msra.mxu0 %v52
    %146 = vmatprep.subr.mxu0 0.0
    %147 = vmatpush1.msra.mxu0 %v55
    %148 = vmatprep.subr.mxu0 0.0
    %149 = vmatpush1.msra.mxu0 0.0
    %150 = vmatprep.subr.mxu0 0.0
    %151 = vmatpush1.msra.mxu0 0.0
    %152 = vmatprep.subr.mxu0 0.0
    %153 = vmatpush1.msra.mxu0 0.0
    %154 = vmatprep.subr.mxu0 0.0
    %155 = vmatpush1.msra.mxu0 0.0
    %156 = vmatprep.subr.mxu0 0.0
    %157 = vmatpush1.msra.mxu0 0.0
    %158 = vmatprep.subr.mxu0 0.0
    %159 = vmatpush1.msra.mxu0 0.0
    %160 = vmatprep.subr.mxu0 0.0
    %161 = vmatpush1.msra.mxu0 0.0
    %162 = vmatprep.subr.mxu0 0.0
    %163 = vmatpush1.msra.mxu0 0.0
    %164 = vmatprep.subr.mxu0 0.0
    %165 = vmatpush1.msra.mxu0 0.0
    %166 = vmatprep.subr.mxu0 0.0
    %167 = vmatpush1.msra.mxu0 0.0
    %168 = vmatprep.subr.mxu0 0.0
    %169 = vmatpush1.msra.mxu0 0.0
    %170 = vmatprep.subr.mxu0 0.0
    %171 = vmatpush1.msra.mxu0 0.0
    %172 = vmatprep.subr.mxu0 0.0
    %173 = vmatpush1.msra.mxu0 0.0
    %174 = vmatprep.subr.mxu0 0.0
    %175 = vmatpush1.msra.mxu0 0.0
    %176 = vmatprep.subr.mxu0 0.0
    %177 = vmatpush1.msra.mxu0 0.0
    %178 = vmatprep.subr.mxu0 0.0
    %179 = vmatpush1.msra.mxu0 0.0
    %180 = vmatprep.subr.mxu0 0.0
    %181 = vmatpush1.msra.mxu0 0.0
    %182 = vmatprep.subr.mxu0 0.0
    %183 = vmatpush1.msra.mxu0 0.0
    %184 = vmatprep.subr.mxu0 0.0
    %185 = vmatpush1.msra.mxu0 0.0
    %186 = vmatprep.subr.mxu0 0.0
    %187 = vmatpush1.msra.mxu0 0.0
    %188 = vmatprep.subr.mxu0 0.0
    %189 = vmatpush1.msra.mxu0 0.0
    %190 = vmatprep.subr.mxu0 0.0
    %191 = vmatpush1.msra.mxu0 0.0
    %192 = vmatprep.subr.mxu0 0.0
    %193 = vmatpush1.msra.mxu0 0.0
    %194 = vmatprep.subr.mxu0 0.0
    %195 = vmatpush1.msra.mxu0 0.0
    %196 = vmatprep.subr.mxu0 0.0
    %197 = vmatpush1.msra.mxu0 0.0
    %198 = vmatprep.subr.mxu0 0.0
    %199 = vmatpush1.msra.mxu0 0.0
    %200 = vmatprep.subr.mxu0 0.0
    %201 = vmatpush1.msra.mxu0 0.0
    %202 = vmatprep.subr.mxu0 0.0
    %203 = vmatpush1.msra.mxu0 0.0
    %204 = vmatprep.mubr.f32.mxu0 0.0
    %205 = vmatmul.mubr.f32.gmra.mrb[0].mxu0 %v58
    %v206 = vpop.f32.mrb[0].mxu0
    %v207 = vadd.f32 0.0, %v206
    %v208 = vpop.f32.mrb[0].mxu0
    %209 = vmatprep.mubr.f32.mxu0 0.0
    %210 = vmatmul.mubr.f32.gmra.mrb[0].mxu0 %v61
    %v211 = vpop.f32.mrb[0].mxu0
    %v212 = vadd.f32 0.0, %v211
    %v213 = vpop.f32.mrb[0].mxu0
    %214 = vdwg.mxu0
    %v215 = vld [vmem:[#allocation4] sm:$0x1]
    %v216 = vlaneseq
    %v217 = vshrl.u32 %v216, 7
    %v218 = vsub.s32 0, %v217
    %v219 = vrot.slane %v215, %v218
    %v220 = vadd.f32 %v130, %v219
    %v221 = vadd.f32 %v136, %v219
    %v222 = vld [vmem:[#allocation4 + $0x1] sm:$0x1]
    %v223 = vlaneseq
    %v224 = vshrl.u32 %v223, 7
    %v225 = vsub.s32 0, %v224
    %v226 = vrot.slane %v222, %v225
    %v227 = vadd.f32 %v132, %v226
    %v228 = vadd.f32 %v138, %v226
    %v229 = vld [vmem:[#allocation4 + $0x2] sm:$0x1]
    %v230 = vlaneseq
    %v231 = vshrl.u32 %v230, 7
    %v232 = vsub.s32 0, %v231
    %v233 = vrot.slane %v229, %v232
    %v234 = vadd.f32 %v207, %v233
    %v235 = vadd.f32 %v212, %v233
    %v236 = vld [vmem:[#allocation4 + $0x20] sm:$0xff]
    %v237 = vld [vmem:[#allocation4 + $0x28] sm:$0xff]
    %v238 = vld [vmem:[#allocation4 + $0x30] sm:$0xff]
    %v239 = vld [vmem:[#allocation4 + $0x38] sm:$0xff]
    %v240 = vld [vmem:[#allocation4 + $0x40] sm:$0xff]
    %v241 = vld [vmem:[#allocation4 + $0x48] sm:$0xff]
    %v242 = vld [vmem:[#allocation4 + $0x50] sm:$0xff]
    %v243 = vld [vmem:[#allocation4 + $0x58] sm:$0xff]
    %v244 = vmul.f32 %v227, %v236
    %v245 = vmul.f32 %v228, %v237
    %v246 = vmul.f32 %v227, %v238
    %v247 = vmul.f32 %v228, %v239
    %v248 = vmul.f32 %v227, %v240
    %v249 = vmul.f32 %v228, %v241
    %v250 = vmul.f32 %v227, %v242
    %v251 = vmul.f32 %v228, %v243
    %v252 = vmul.f32 %v234, %v236
    %v253 = vmul.f32 %v235, %v237
    %v254 = vmul.f32 %v234, %v238
    %v255 = vmul.f32 %v235, %v239
    %v256 = vmul.f32 %v234, %v240
    %v257 = vmul.f32 %v235, %v241
    %v258 = vmul.f32 %v234, %v242
    %v259 = vmul.f32 %v235, %v243
    %v260 = vld [vmem:[#allocation4 + $0x10] sm:$0xff]
    %v261 = vld [vmem:[#allocation4 + $0x18] sm:$0xff]
    %v263 = vsel %vm56, %v220, 0
    %v266 = vsel %vm56, %v221, 0
    %v269 = vsel %vm56, %v244, 0
    %v272 = vsel %vm56, %v245, 0
    %v275 = vsel %vm56, %v246, 0
    %v278 = vsel %vm56, %v247, 0
    %v281 = vsel %vm56, %v248, 0
    %v284 = vsel %vm56, %v249, 0
    %v287 = vsel %vm56, %v250, 0
    %v290 = vsel %vm56, %v251, 0
    %292 = vmatprep.subr.mxu0 0.0
    %293 = vmatpush1.xpose.msra.mxu0 %v269
    %294 = vmatprep.subr.mxu0 0.0
    %295 = vmatpush1.xpose.msra.mxu0 %v272
    %296 = vmatprep.subr.mxu0 0.0
    %297 = vmatpush1.xpose.msra.mxu0 %v275
    %298 = vmatprep.subr.mxu0 0.0
    %299 = vmatpush1.xpose.msra.mxu0 %v278
    %300 = vmatprep.subr.mxu0 0.0
    %301 = vmatpush1.xpose.msra.mxu0 %v281
    %302 = vmatprep.subr.mxu0 0.0
    %303 = vmatpush1.xpose.msra.mxu0 %v284
    %304 = vmatprep.subr.mxu0 0.0
    %305 = vmatpush1.xpose.msra.mxu0 %v287
    %306 = vmatprep.subr.mxu0 0.0
    %307 = vmatpush1.xpose.msra.mxu0 %v290
    %308 = vmatprep.subr.mxu0 0.0
    %309 = vmatpush1.xpose.msra.mxu0 0.0
    %310 = vmatprep.subr.mxu0 0.0
    %311 = vmatpush1.xpose.msra.mxu0 0.0
    %312 = vmatprep.subr.mxu0 0.0
    %313 = vmatpush1.xpose.msra.mxu0 0.0
    %314 = vmatprep.subr.mxu0 0.0
    %315 = vmatpush1.xpose.msra.mxu0 0.0
    %316 = vmatprep.subr.mxu0 0.0
    %317 = vmatpush1.xpose.msra.mxu0 0.0
    %318 = vmatprep.subr.mxu0 0.0
    %319 = vmatpush1.xpose.msra.mxu0 0.0
    %320 = vmatprep.subr.mxu0 0.0
    %321 = vmatpush1.xpose.msra.mxu0 0.0
    %322 = vmatprep.subr.mxu0 0.0
    %323 = vmatpush1.xpose.msra.mxu0 0.0
    %324 = vmatprep.subr.mxu0 0.0
    %325 = vmatpush1.xpose.msra.mxu0 0.0
    %326 = vmatprep.subr.mxu0 0.0
    %327 = vmatpush1.xpose.msra.mxu0 0.0
    %328 = vmatprep.subr.mxu0 0.0
    %329 = vmatpush1.xpose.msra.mxu0 0.0
    %330 = vmatprep.subr.mxu0 0.0
    %331 = vmatpush1.xpose.msra.mxu0 0.0
    %332 = vmatprep.subr.mxu0 0.0
    %333 = vmatpush1.xpose.msra.mxu0 0.0
    %334 = vmatprep.subr.mxu0 0.0
    %335 = vmatpush1.xpose.msra.mxu0 0.0
    %336 = vmatprep.subr.mxu0 0.0
    %337 = vmatpush1.xpose.msra.mxu0 0.0
    %338 = vmatprep.subr.mxu0 0.0
    %339 = vmatpush1.xpose.msra.mxu0 0.0
    %340 = vmatprep.subr.mxu0 0.0
    %341 = vmatpush1.xpose.msra.mxu0 0.0
    %342 = vmatprep.subr.mxu0 0.0
    %343 = vmatpush1.xpose.msra.mxu0 0.0
    %344 = vmatprep.subr.mxu0 0.0
    %345 = vmatpush1.xpose.msra.mxu0 0.0
    %346 = vmatprep.subr.mxu0 0.0
    %347 = vmatpush1.xpose.msra.mxu0 0.0
    %348 = vmatprep.subr.mxu0 0.0
    %349 = vmatpush1.xpose.msra.mxu0 0.0
    %350 = vmatprep.subr.mxu0 0.0
    %351 = vmatpush1.xpose.msra.mxu0 0.0
    %352 = vmatprep.subr.mxu0 0.0
    %353 = vmatpush1.xpose.msra.mxu0 0.0
    %354 = vmatprep.subr.mxu0 0.0
    %355 = vmatpush1.xpose.msra.mxu0 0.0
    %356 = vmatprep.mubr.f32.mxu0 0.0
    %357 = vmatmul.mubr.f32.gmra.mrb[0].mxu0 %v263
    %v358 = vpop.f32.mrb[0].mxu0
    %v359 = vadd.f32 %v260, %v358
    %v360 = vpop.f32.mrb[0].mxu0
    %361 = vmatprep.mubr.f32.mxu0 0.0
    %362 = vmatmul.mubr.f32.gmra.mrb[0].mxu0 %v266
    %v363 = vpop.f32.mrb[0].mxu0
    %v364 = vadd.f32 %v261, %v363
    %v365 = vpop.f32.mrb[0].mxu0
    %366 = vdwg.mxu0
    %vm367 = vcmask 523264
    %v368 = vsel %vm367, %v359, -inf
    %369 = vmax.xlane.f32.xlu0 %v368
    %v370 = vpop.xlane.xlu0 %369
    %v371 = vsel %vm367, %v364, -inf
    %372 = vmax.xlane.f32.xlu0 %v371
    %v373 = vpop.xlane.xlu0 %372
    %v374 = vsub.f32 %v359, %v370
    %v375 = vsub.f32 %v364, %v373
    %v376 = vmul.f32 %v374, 1.442695
    %v377 = vpow.pop %v376
    %v378 = vmul.f32 %v375, 1.442695
    %v379 = vpow.pop %v378
    %v381 = vsel %vm367, %v377, 0
    %v384 = vsel %vm367, %v379, 0
    %386 = vmatprep.subr.mxu0 0.0
    %387 = vmatpush1.msra.mxu0 %v236
    %388 = vmatprep.subr.mxu0 0.0
    %389 = vmatpush1.msra.mxu0 %v237
    %390 = vmatprep.subr.mxu0 0.0
    %391 = vmatpush1.msra.mxu0 %v238
    %392 = vmatprep.subr.mxu0 0.0
    %393 = vmatpush1.msra.mxu0 %v239
    %394 = vmatprep.subr.mxu0 0.0
    %395 = vmatpush1.msra.mxu0 %v240
    %396 = vmatprep.subr.mxu0 0.0
    %397 = vmatpush1.msra.mxu0 %v241
    %398 = vmatprep.subr.mxu0 0.0
    %399 = vmatpush1.msra.mxu0 %v242
    %400 = vmatprep.subr.mxu0 0.0
    %401 = vmatpush1.msra.mxu0 %v243
    %402 = vmatprep.subr.mxu0 0.0
    %403 = vmatpush1.msra.mxu0 0.0
    %404 = vmatprep.subr.mxu0 0.0
    %405 = vmatpush1.msra.mxu0 0.0
    %406 = vmatprep.subr.mxu0 0.0
    %407 = vmatpush1.msra.mxu0 0.0
    %408 = vmatprep.subr.mxu0 0.0
    %409 = vmatpush1.msra.mxu0 0.0
    %410 = vmatprep.subr.mxu0 0.0
    %411 = vmatpush1.msra.mxu0 0.0
    %412 = vmatprep.subr.mxu0 0.0
    %413 = vmatpush1.msra.mxu0 0.0
    %414 = vmatprep.subr.mxu0 0.0
    %415 = vmatpush1.msra.mxu0 0.0
    %416 = vmatprep.subr.mxu0 0.0
    %417 = vmatpush1.msra.mxu0 0.0
    %418 = vmatprep.subr.mxu0 0.0
    %419 = vmatpush1.msra.mxu0 0.0
    %420 = vmatprep.subr.mxu0 0.0
    %421 = vmatpush1.msra.mxu0 0.0
    %422 = vmatprep.subr.mxu0 0.0
    %423 = vmatpush1.msra.mxu0 0.0
    %424 = vmatprep.subr.mxu0 0.0
    %425 = vmatpush1.msra.mxu0 0.0
    %426 = vmatprep.subr.mxu0 0.0
    %427 = vmatpush1.msra.mxu0 0.0
    %428 = vmatprep.subr.mxu0 0.0
    %429 = vmatpush1.msra.mxu0 0.0
    %430 = vmatprep.subr.mxu0 0.0
    %431 = vmatpush1.msra.mxu0 0.0
    %432 = vmatprep.subr.mxu0 0.0
    %433 = vmatpush1.msra.mxu0 0.0
    %434 = vmatprep.subr.mxu0 0.0
    %435 = vmatpush1.msra.mxu0 0.0
    %436 = vmatprep.subr.mxu0 0.0
    %437 = vmatpush1.msra.mxu0 0.0
    %438 = vmatprep.subr.mxu0 0.0
    %439 = vmatpush1.msra.mxu0 0.0
    %440 = vmatprep.subr.mxu0 0.0
    %441 = vmatpush1.msra.mxu0 0.0
    %442 = vmatprep.subr.mxu0 0.0
    %443 = vmatpush1.msra.mxu0 0.0
    %444 = vmatprep.subr.mxu0 0.0
    %445 = vmatpush1.msra.mxu0 0.0
    %446 = vmatprep.subr.mxu0 0.0
    %447 = vmatpush1.msra.mxu0 0.0
    %448 = vmatprep.subr.mxu0 0.0
    %449 = vmatpush1.msra.mxu0 0.0
    %450 = vmatprep.mubr.f32.mxu0 0.0
    %451 = vmatmul.mubr.f32.gmra.mrb[0].mxu0 %v381
    %v452 = vpop.f32.mrb[0].mxu0
    %v453 = vadd.f32 0.0, %v452
    %v454 = vpop.f32.mrb[0].mxu0
    %455 = vmatprep.mubr.f32.mxu0 0.0
    %456 = vmatmul.mubr.f32.gmra.mrb[0].mxu0 %v384
    %v457 = vpop.f32.mrb[0].mxu0
    %v458 = vadd.f32 0.0, %v457
    %v459 = vpop.f32.mrb[0].mxu0
    %460 = vdwg.mxu0
    %461 = vmatprep.subr.mxu0 0.0
    %462 = vmatpush1.msra.mxu0 %v252
    %463 = vmatprep.subr.mxu0 0.0
    %464 = vmatpush1.msra.mxu0 %v253
    %465 = vmatprep.subr.mxu0 0.0
    %466 = vmatpush1.msra.mxu0 %v254
    %467 = vmatprep.subr.mxu0 0.0
    %468 = vmatpush1.msra.mxu0 %v255
    %469 = vmatprep.subr.mxu0 0.0
    %470 = vmatpush1.msra.mxu0 %v256
    %471 = vmatprep.subr.mxu0 0.0
    %472 = vmatpush1.msra.mxu0 %v257
    %473 = vmatprep.subr.mxu0 0.0
    %474 = vmatpush1.msra.mxu0 %v258
    %475 = vmatprep.subr.mxu0 0.0
    %476 = vmatpush1.msra.mxu0 %v259
    %477 = vmatprep.subr.mxu0 0.0
    %478 = vmatpush1.msra.mxu0 0.0
    %479 = vmatprep.subr.mxu0 0.0
    %480 = vmatpush1.msra.mxu0 0.0
    %481 = vmatprep.subr.mxu0 0.0
    %482 = vmatpush1.msra.mxu0 0.0
    %483 = vmatprep.subr.mxu0 0.0
    %484 = vmatpush1.msra.mxu0 0.0
    %485 = vmatprep.subr.mxu0 0.0
    %486 = vmatpush1.msra.mxu0 0.0
    %487 = vmatprep.subr.mxu0 0.0
    %488 = vmatpush1.msra.mxu0 0.0
    %489 = vmatprep.subr.mxu0 0.0
    %490 = vmatpush1.msra.mxu0 0.0
    %491 = vmatprep.subr.mxu0 0.0
    %492 = vmatpush1.msra.mxu0 0.0
    %493 = vmatprep.subr.mxu0 0.0
    %494 = vmatpush1.msra.mxu0 0.0
    %495 = vmatprep.subr.mxu0 0.0
    %496 = vmatpush1.msra.mxu0 0.0
    %497 = vmatprep.subr.mxu0 0.0
    %498 = vmatpush1.msra.mxu0 0.0
    %499 = vmatprep.subr.mxu0 0.0
    %500 = vmatpush1.msra.mxu0 0.0
    %501 = vmatprep.subr.mxu0 0.0
    %502 = vmatpush1.msra.mxu0 0.0
    %503 = vmatprep.subr.mxu0 0.0
    %504 = vmatpush1.msra.mxu0 0.0
    %505 = vmatprep.subr.mxu0 0.0
    %506 = vmatpush1.msra.mxu0 0.0
    %507 = vmatprep.subr.mxu0 0.0
    %508 = vmatpush1.msra.mxu0 0.0
    %509 = vmatprep.subr.mxu0 0.0
    %510 = vmatpush1.msra.mxu0 0.0
    %511 = vmatprep.subr.mxu0 0.0
    %512 = vmatpush1.msra.mxu0 0.0
    %513 = vmatprep.subr.mxu0 0.0
    %514 = vmatpush1.msra.mxu0 0.0
    %515 = vmatprep.subr.mxu0 0.0
    %516 = vmatpush1.msra.mxu0 0.0
    %517 = vmatprep.subr.mxu0 0.0
    %518 = vmatpush1.msra.mxu0 0.0
    %519 = vmatprep.subr.mxu0 0.0
    %520 = vmatpush1.msra.mxu0 0.0
    %521 = vmatprep.subr.mxu0 0.0
    %522 = vmatpush1.msra.mxu0 0.0
    %523 = vmatprep.subr.mxu0 0.0
    %524 = vmatpush1.msra.mxu0 0.0
    %525 = vmatprep.mubr.f32.mxu0 0.0
    %526 = vmatmul.mubr.f32.gmra.mrb[0].mxu0 %v381
    %v527 = vpop.f32.mrb[0].mxu0
    %v528 = vadd.f32 0.0, %v527
    %v529 = vpop.f32.mrb[0].mxu0
    %530 = vmatprep.mubr.f32.mxu0 0.0
    %531 = vmatmul.mubr.f32.gmra.mrb[0].mxu0 %v384
    %v532 = vpop.f32.mrb[0].mxu0
    %v533 = vadd.f32 0.0, %v532
    %v534 = vpop.f32.mrb[0].mxu0
    %535 = vdwg.mxu0
    %v536 = vrcp.pop %v453
    %v537 = vrcp.pop %v458
    %v538 = vmul.f32 %v528, %v536
    %v539 = vmul.f32 %v533, %v537
    %v540 = vld [vmem:[#allocation4 + $0x60] sm:$0xff]
    %v541 = vld [vmem:[#allocation4 + $0x68] sm:$0xff]
    %v542 = vld [vmem:[#allocation4 + $0x70] sm:$0xff]
    %v543 = vld [vmem:[#allocation4 + $0x78] sm:$0xff]
    %v544 = vld [vmem:[#allocation4 + $0x3] sm:$0x1]
    %v545 = vlaneseq
    %v546 = vshrl.u32 %v545, 7
    %v547 = vsub.s32 0, %v546
    %v548 = vrot.slane %v544, %v547
    %v550 = vsel %vm56, %v538, 0
    %v553 = vsel %vm56, %v539, 0
    %555 = vmatprep.subr.mxu0 0.0
    %556 = vmatpush1.msra.mxu0 %v540
    %557 = vmatprep.subr.mxu0 0.0
    %558 = vmatpush1.msra.mxu0 %v541
    %559 = vmatprep.subr.mxu0 0.0
    %560 = vmatpush1.msra.mxu0 %v542
    %561 = vmatprep.subr.mxu0 0.0
    %562 = vmatpush1.msra.mxu0 %v543
    %563 = vmatprep.subr.mxu0 0.0
    %564 = vmatpush1.msra.mxu0 0.0
    %565 = vmatprep.subr.mxu0 0.0
    %566 = vmatpush1.msra.mxu0 0.0
    %567 = vmatprep.subr.mxu0 0.0
    %568 = vmatpush1.msra.mxu0 0.0
    %569 = vmatprep.subr.mxu0 0.0
    %570 = vmatpush1.msra.mxu0 0.0
    %571 = vmatprep.subr.mxu0 0.0
    %572 = vmatpush1.msra.mxu0 0.0
    %573 = vmatprep.subr.mxu0 0.0
    %574 = vmatpush1.msra.mxu0 0.0
    %575 = vmatprep.subr.mxu0 0.0
    %576 = vmatpush1.msra.mxu0 0.0
    %577 = vmatprep.subr.mxu0 0.0
    %578 = vmatpush1.msra.mxu0 0.0
    %579 = vmatprep.subr.mxu0 0.0
    %580 = vmatpush1.msra.mxu0 0.0
    %581 = vmatprep.subr.mxu0 0.0
    %582 = vmatpush1.msra.mxu0 0.0
    %583 = vmatprep.subr.mxu0 0.0
    %584 = vmatpush1.msra.mxu0 0.0
    %585 = vmatprep.subr.mxu0 0.0
    %586 = vmatpush1.msra.mxu0 0.0
    %587 = vmatprep.subr.mxu0 0.0
    %588 = vmatpush1.msra.mxu0 0.0
    %589 = vmatprep.subr.mxu0 0.0
    %590 = vmatpush1.msra.mxu0 0.0
    %591 = vmatprep.subr.mxu0 0.0
    %592 = vmatpush1.msra.mxu0 0.0
    %593 = vmatprep.subr.mxu0 0.0
    %594 = vmatpush1.msra.mxu0 0.0
    %595 = vmatprep.subr.mxu0 0.0
    %596 = vmatpush1.msra.mxu0 0.0
    %597 = vmatprep.subr.mxu0 0.0
    %598 = vmatpush1.msra.mxu0 0.0
    %599 = vmatprep.subr.mxu0 0.0
    %600 = vmatpush1.msra.mxu0 0.0
    %601 = vmatprep.subr.mxu0 0.0
    %602 = vmatpush1.msra.mxu0 0.0
    %603 = vmatprep.subr.mxu0 0.0
    %604 = vmatpush1.msra.mxu0 0.0
    %605 = vmatprep.subr.mxu0 0.0
    %606 = vmatpush1.msra.mxu0 0.0
    %607 = vmatprep.subr.mxu0 0.0
    %608 = vmatpush1.msra.mxu0 0.0
    %609 = vmatprep.subr.mxu0 0.0
    %610 = vmatpush1.msra.mxu0 0.0
    %611 = vmatprep.subr.mxu0 0.0
    %612 = vmatpush1.msra.mxu0 0.0
    %613 = vmatprep.subr.mxu0 0.0
    %614 = vmatpush1.msra.mxu0 0.0
    %615 = vmatprep.subr.mxu0 0.0
    %616 = vmatpush1.msra.mxu0 0.0
    %617 = vmatprep.subr.mxu0 0.0
    %618 = vmatpush1.msra.mxu0 0.0
    %619 = vmatprep.mubr.f32.mxu0 0.0
    %620 = vmatmul.mubr.f32.gmra.mrb[0].mxu0 %v550
    %v621 = vpop.f32.mrb[0].mxu0
    %v622 = vadd.f32 %v548, %v621
    %v623 = vpop.f32.mrb[0].mxu0
    %624 = vmatprep.mubr.f32.mxu0 0.0
    %625 = vmatmul.mubr.f32.gmra.mrb[0].mxu0 %v553
    %v626 = vpop.f32.mrb[0].mxu0
    %v627 = vadd.f32 %v548, %v626
    %v628 = vpop.f32.mrb[0].mxu0
    %629 = vdwg.mxu0
    %v630 = vadd.f32 %v42, %v622
    %v631 = vadd.f32 %v43, %v627
    %632 = vadd.xlane.f32.xlu0 %v630
    %v633 = vpop.xlane.xlu0 %632
    %634 = vadd.xlane.f32.xlu0 %v631
    %v635 = vpop.xlane.xlu0 %634
    %v636 = vmul.f32 %v633, 0.03125
    %v637 = vmul.f32 %v635, 0.03125
    %v638 = vmul.f32 %v630, %v630
    %v639 = vmul.f32 %v631, %v631
    %640 = vadd.xlane.f32.xlu0 %v638
    %v641 = vpop.xlane.xlu0 %640
    %642 = vadd.xlane.f32.xlu0 %v639
    %v643 = vpop.xlane.xlu0 %642
    %v644 = vmul.f32 %v641, 0.03125
    %v645 = vmul.f32 %v643, 0.03125
    %v646 = vmul.f32 %v636, %v636
    %v647 = vmul.f32 %v637, %v637
    %v648 = vsub.f32 %v644, %v646
    %v649 = vsub.f32 %v645, %v647
    %v650 = vsub.f32 %v630, %v636
    %v651 = vsub.f32 %v631, %v637
    %v652 = vadd.f32 %v648, 1e-05
    %v653 = vadd.f32 %v649, 1e-05
    %v654 = vrsqrt.pop %v652
    %v655 = vrsqrt.pop %v653
    %v656 = vmul.f32 %v650, %v654
    %v657 = vmul.f32 %v651, %v655
    %v658 = vld [vmem:[#allocation4 + $0x6] sm:$0x1]
    %v659 = vlaneseq
    %v660 = vshrl.u32 %v659, 7
    %v661 = vsub.s32 0, %v660
    %v662 = vrot.slane %v658, %v661
    %v663 = vmul.f32 %v656, %v662
    %v664 = vmul.f32 %v657, %v662
    %v665 = vld [vmem:[#allocation4 + $0x7] sm:$0x1]
    %v666 = vlaneseq
    %v667 = vshrl.u32 %v666, 7
    %v668 = vsub.s32 0, %v667
    %v669 = vrot.slane %v665, %v668
    %v670 = vadd.f32 %v663, %v669
    %v671 = vadd.f32 %v664, %v669
    %v672 = vld [vmem:[#allocation4 + $0x80] sm:$0xff]
    %v673 = vld [vmem:[#allocation4 + $0x88] sm:$0xff]
    %v674 = vld [vmem:[#allocation4 + $0x90] sm:$0xff]
    %v675 = vld [vmem:[#allocation4 + $0x98] sm:$0xff]
    %v676 = vld [vmem:[#allocation4 + $0x4] sm:$0x1]
    %v677 = vlaneseq
    %v678 = vshrl.u32 %v677, 7
    %v679 = vsub.s32 0, %v678
    %v680 = vrot.slane %v676, %v679
    %v682 = vsel %vm56, %v670, 0
    %v685 = vsel %vm56, %v671, 0
    %687 = vmatprep.subr.mxu0 0.0
    %688 = vmatpush1.msra.mxu0 %v672
    %689 = vmatprep.subr.mxu0 0.0
    %690 = vmatpush1.msra.mxu0 %v673
    %691 = vmatprep.subr.mxu0 0.0
    %692 = vmatpush1.msra.mxu0 %v674
    %693 = vmatprep.subr.mxu0 0.0
    %694 = vmatpush1.msra.mxu0 %v675
    %695 = vmatprep.subr.mxu0 0.0
    %696 = vmatpush1.msra.mxu0 0.0
    %697 = vmatprep.subr.mxu0 0.0
    %698 = vmatpush1.msra.mxu0 0.0
    %699 = vmatprep.subr.mxu0 0.0
    %700 = vmatpush1.msra.mxu0 0.0
    %701 = vmatprep.subr.mxu0 0.0
    %702 = vmatpush1.msra.mxu0 0.0
    %703 = vmatprep.subr.mxu0 0.0
    %704 = vmatpush1.msra.mxu0 0.0
    %705 = vmatprep.subr.mxu0 0.0
    %706 = vmatpush1.msra.mxu0 0.0
    %707 = vmatprep.subr.mxu0 0.0
    %708 = vmatpush1.msra.mxu0 0.0
    %709 = vmatprep.subr.mxu0 0.0
    %710 = vmatpush1.msra.mxu0 0.0
    %711 = vmatprep.subr.mxu0 0.0
    %712 = vmatpush1.msra.mxu0 0.0
    %713 = vmatprep.subr.mxu0 0.0
    %714 = vmatpush1.msra.mxu0 0.0
    %715 = vmatprep.subr.mxu0 0.0
    %716 = vmatpush1.msra.mxu0 0.0
    %717 = vmatprep.subr.mxu0 0.0
    %718 = vmatpush1.msra.mxu0 0.0
    %719 = vmatprep.subr.mxu0 0.0
    %720 = vmatpush1.msra.mxu0 0.0
    %721 = vmatprep.subr.mxu0 0.0
    %722 = vmatpush1.msra.mxu0 0.0
    %723 = vmatprep.subr.mxu0 0.0
    %724 = vmatpush1.msra.mxu0 0.0
    %725 = vmatprep.subr.mxu0 0.0
    %726 = vmatpush1.msra.mxu0 0.0
    %727 = vmatprep.subr.mxu0 0.0
    %728 = vmatpush1.msra.mxu0 0.0
    %729 = vmatprep.subr.mxu0 0.0
    %730 = vmatpush1.msra.mxu0 0.0
    %731 = vmatprep.subr.mxu0 0.0
    %732 = vmatpush1.msra.mxu0 0.0
    %733 = vmatprep.subr.mxu0 0.0
    %734 = vmatpush1.msra.mxu0 0.0
    %735 = vmatprep.subr.mxu0 0.0
    %736 = vmatpush1.msra.mxu0 0.0
    %737 = vmatprep.subr.mxu0 0.0
    %738 = vmatpush1.msra.mxu0 0.0
    %739 = vmatprep.subr.mxu0 0.0
    %740 = vmatpush1.msra.mxu0 0.0
    %741 = vmatprep.subr.mxu0 0.0
    %742 = vmatpush1.msra.mxu0 0.0
    %743 = vmatprep.subr.mxu0 0.0
    %744 = vmatpush1.msra.mxu0 0.0
    %745 = vmatprep.subr.mxu0 0.0
    %746 = vmatpush1.msra.mxu0 0.0
    %747 = vmatprep.subr.mxu0 0.0
    %748 = vmatpush1.msra.mxu0 0.0
    %749 = vmatprep.subr.mxu0 0.0
    %750 = vmatpush1.msra.mxu0 0.0
    %751 = vmatprep.mubr.f32.mxu0 0.0
    %752 = vmatmul.mubr.f32.gmra.mrb[0].mxu0 %v682
    %v753 = vpop.f32.mrb[0].mxu0
    %v754 = vadd.f32 %v680, %v753
    %v755 = vpop.f32.mrb[0].mxu0
    %756 = vmatprep.mubr.f32.mxu0 0.0
    %757 = vmatmul.mubr.f32.gmra.mrb[0].mxu0 %v685
    %v758 = vpop.f32.mrb[0].mxu0
    %v759 = vadd.f32 %v680, %v758
    %v760 = vpop.f32.mrb[0].mxu0
    %761 = vdwg.mxu0
    %v762 = vmax.f32 %v754, 0.0
    %v763 = vmax.f32 %v759, 0.0
    %v764 = vld [vmem:[#allocation4 + $0xa0] sm:$0xff]
    %v765 = vld [vmem:[#allocation4 + $0xa8] sm:$0xff]
    %v766 = vld [vmem:[#allocation4 + $0xb0] sm:$0xff]
    %v767 = vld [vmem:[#allocation4 + $0xb8] sm:$0xff]
    %v768 = vld [vmem:[#allocation4 + $0xc0] sm:$0xff]
    %v769 = vld [vmem:[#allocation4 + $0xc8] sm:$0xff]
    %v770 = vld [vmem:[#allocation4 + $0xd0] sm:$0xff]
    %v771 = vld [vmem:[#allocation4 + $0xd8] sm:$0xff]
    %v772 = vld [vmem:[#allocation4 + $0x5] sm:$0x1]
    %v773 = vlaneseq
    %v774 = vshrl.u32 %v773, 7
    %v775 = vsub.s32 0, %v774
    %v776 = vrot.slane %v772, %v775
    %v778 = vsel %vm367, %v762, 0
    %v781 = vsel %vm367, %v763, 0
    %783 = vmatprep.subr.mxu0 0.0
    %784 = vmatpush1.msra.mxu0 %v764
    %785 = vmatprep.subr.mxu0 0.0
    %786 = vmatpush1.msra.mxu0 %v765
    %787 = vmatprep.subr.mxu0 0.0
    %788 = vmatpush1.msra.mxu0 %v766
    %789 = vmatprep.subr.mxu0 0.0
    %790 = vmatpush1.msra.mxu0 %v767
    %791 = vmatprep.subr.mxu0 0.0
    %792 = vmatpush1.msra.mxu0 %v768
    %793 = vmatprep.subr.mxu0 0.0
    %794 = vmatpush1.msra.mxu0 %v769
    %795 = vmatprep.subr.mxu0 0.0
    %796 = vmatpush1.msra.mxu0 %v770
    %797 = vmatprep.subr.mxu0 0.0
    %798 = vmatpush1.msra.mxu0 %v771
    %799 = vmatprep.subr.mxu0 0.0
    %800 = vmatpush1.msra.mxu0 0.0
    %801 = vmatprep.subr.mxu0 0.0
    %802 = vmatpush1.msra.mxu0 0.0
    %803 = vmatprep.subr.mxu0 0.0
    %804 = vmatpush1.msra.mxu0 0.0
    %805 = vmatprep.subr.mxu0 0.0
    %806 = vmatpush1.msra.mxu0 0.0
    %807 = vmatprep.subr.mxu0 0.0
    %808 = vmatpush1.msra.mxu0 0.0
    %809 = vmatprep.subr.mxu0 0.0
    %810 = vmatpush1.msra.mxu0 0.0
    %811 = vmatprep.subr.mxu0 0.0
    %812 = vmatpush1.msra.mxu0 0.0
    %813 = vmatprep.subr.mxu0 0.0
    %814 = vmatpush1.msra.mxu0 0.0
    %815 = vmatprep.subr.mxu0 0.0
    %816 = vmatpush1.msra.mxu0 0.0
    %817 = vmatprep.subr.mxu0 0.0
    %818 = vmatpush1.msra.mxu0 0.0
    %819 = vmatprep.subr.mxu0 0.0
    %820 = vmatpush1.msra.mxu0 0.0
    %821 = vmatprep.subr.mxu0 0.0
    %822 = vmatpush1.msra.mxu0 0.0
    %823 = vmatprep.subr.mxu0 0.0
    %824 = vmatpush1.msra.mxu0 0.0
    %825 = vmatprep.subr.mxu0 0.0
    %826 = vmatpush1.msra.mxu0 0.0
    %827 = vmatprep.subr.mxu0 0.0
    %828 = vmatpush1.msra.mxu0 0.0
    %829 = vmatprep.subr.mxu0 0.0
    %830 = vmatpush1.msra.mxu0 0.0
    %831 = vmatprep.subr.mxu0 0.0
    %832 = vmatpush1.msra.mxu0 0.0
    %833 = vmatprep.subr.mxu0 0.0
    %834 = vmatpush1.msra.mxu0 0.0
    %835 = vmatprep.subr.mxu0 0.0
    %836 = vmatpush1.msra.mxu0 0.0
    %837 = vmatprep.subr.mxu0 0.0
    %838 = vmatpush1.msra.mxu0 0.0
    %839 = vmatprep.subr.mxu0 0.0
    %840 = vmatpush1.msra.mxu0 0.0
    %841 = vmatprep.subr.mxu0 0.0
    %842 = vmatpush1.msra.mxu0 0.0
    %843 = vmatprep.subr.mxu0 0.0
    %844 = vmatpush1.msra.mxu0 0.0
    %845 = vmatprep.subr.mxu0 0.0
    %846 = vmatpush1.msra.mxu0 0.0
    %847 = vmatprep.mubr.f32.mxu0 0.0
    %848 = vmatmul.mubr.f32.gmra.mrb[0].mxu0 %v778
    %v849 = vpop.f32.mrb[0].mxu0
    %v850 = vadd.f32 %v776, %v849
    %v851 = vpop.f32.mrb[0].mxu0
    %852 = vmatprep.mubr.f32.mxu0 0.0
    %853 = vmatmul.mubr.f32.gmra.mrb[0].mxu0 %v781
    %v854 = vpop.f32.mrb[0].mxu0
    %v855 = vadd.f32 %v776, %v854
    %v856 = vpop.f32.mrb[0].mxu0
    %857 = vdwg.mxu0
    %v858 = vadd.f32 %v670, %v850
    %v859 = vadd.f32 %v671, %v855
    %860 = vadd.xlane.f32.xlu0 %v858
    %v861 = vpop.xlane.xlu0 %860
    %862 = vadd.xlane.f32.xlu0 %v859
    %v863 = vpop.xlane.xlu0 %862
    %v864 = vmul.f32 %v861, 0.03125
    %v865 = vmul.f32 %v863, 0.03125
    %v866 = vmul.f32 %v858, %v858
    %v867 = vmul.f32 %v859, %v859
    %868 = vadd.xlane.f32.xlu0 %v866
    %v869 = vpop.xlane.xlu0 %868
    %870 = vadd.xlane.f32.xlu0 %v867
    %v871 = vpop.xlane.xlu0 %870
    %v872 = vmul.f32 %v869, 0.03125
    %v873 = vmul.f32 %v871, 0.03125
    %v874 = vmul.f32 %v864, %v864
    %v875 = vmul.f32 %v865, %v865
    %v876 = vsub.f32 %v872, %v874
    %v877 = vsub.f32 %v873, %v875
    %v878 = vsub.f32 %v858, %v864
    %v879 = vsub.f32 %v859, %v865
    %v880 = vadd.f32 %v876, 1e-05
    %v881 = vadd.f32 %v877, 1e-05
    %v882 = vrsqrt.pop %v880
    %v883 = vrsqrt.pop %v881
    %v884 = vmul.f32 %v878, %v882
    %v885 = vmul.f32 %v879, %v883
    %v886 = vld [vmem:[#allocation4 + $0x8] sm:$0x1]
    %v887 = vlaneseq
    %v888 = vshrl.u32 %v887, 7
    %v889 = vsub.s32 0, %v888
    %v890 = vrot.slane %v886, %v889
    %v891 = vmul.f32 %v884, %v890
    %v892 = vmul.f32 %v885, %v890
    %v893 = vld [vmem:[#allocation4 + $0x9] sm:$0x1]
    %v894 = vlaneseq
    %v895 = vshrl.u32 %v894, 7
    %v896 = vsub.s32 0, %v895
    %v897 = vrot.slane %v893, %v896
    %v898 = vadd.f32 %v891, %v897
    %v899 = vadd.f32 %v892, %v897
    %900 = vst [vmem:[%s3] sm:$0xff] %v898
    %901 = vst [vmem:[%s3 + $0x8] sm:$0xff] %v899
    // Predicated region
    $region22: #{transformer_block.1} parent=1 // pred_check
      _
    $region23: #{transformer_block.1} parent=1 // pred_check_branch
      %903 = sbr.rel (0) target = $region25
    $region24: #{transformer_block.1} parent=1 // pred_region
      _
    $region25: #{transformer_block.1} parent=1 // pred_fallthru
      _
    // Predicated region
    $region26: #{transformer_block.1} parent=1 // pred_check
      _
    $region27: #{transformer_block.1} parent=1 // pred_check_branch
      %905 = sbr.rel (0) target = $region29
    $region28: #{transformer_block.1} parent=1 // pred_region
      _
    $region29: #{transformer_block.1} parent=1 // pred_fallthru
      _
    %906 = vsyncpa [#allocation3], 1
    %907 = vsyncpa [#allocation5], 1

</llo_original>
